<compile_context>
chip_gen: v7x
topology: tpu7x:2x2x1
jax: 0.10.0
libtpu: 0.0.40
codegen_flags: <defaults>
</compile_context>

<pallas_src>
import functools

import jax
import jax.numpy as jnp
from jax.experimental import pallas as pl
from jax.experimental.pallas import tpu as pltpu


_VMEM_LIMIT_BYTES = 40 * 1024 * 1024   # safe on v7x (64 MiB/TC), fine on v5e/v6e
_K_SINGLE_SHOT_MAX = 2048              # K <= this -> one reduction step, no K pad
_TK = 1024                             # K tile when the reduction axis is tiled


def _round_up(x, m):
    return ((x + m - 1) // m) * m


# ---------------------------------------------------------------------------
# Kernels
# ---------------------------------------------------------------------------
def _linear_single_k_kernel(x_ref, w_ref, b_ref, o_ref):
    """o = x @ w + b with the whole reduction in one step.

    Scratch-free and branch-free: the result goes straight to the f32 output
    block (no VMEM accumulator, no pl.when init/finalize)."""
    x = x_ref[...].astype(jnp.bfloat16)
    o_ref[...] = (
        jnp.dot(x, w_ref[...], preferred_element_type=jnp.float32) + b_ref[...]
    ).astype(o_ref.dtype)


def _linear_tiled_k_kernel(x_ref, w_ref, b_ref, o_ref):
    """Tiled-K o = x @ w + b.  The output block index is K-invariant, so the
    f32 output tile stays VMEM-resident across the reduction axis and we
    accumulate directly into it (no separate scratch accumulator)."""
    k = pl.program_id(2)

    @pl.when(k == 0)
    def _init():
        o_ref[...] = jnp.zeros_like(o_ref)

    x = x_ref[...].astype(jnp.bfloat16)
    o_ref[...] += jnp.dot(x, w_ref[...], preferred_element_type=jnp.float32)

    @pl.when(k == pl.num_programs(2) - 1)
    def _bias():
        o_ref[...] += b_ref[...]


# ---------------------------------------------------------------------------
# pallas_call wrapper
# ---------------------------------------------------------------------------
def _linear_policy_padded(x_p, w_p, b_p, *, tm, tn, tk):
    """x_p [Mp, Kp] (f32 or bf16), w_p [Kp, Np] bf16, b_p [1, Np] f32
    -> [Mp, Np] f32.   Mp % tm == 0, Np % tn == 0.
    tk == Kp selects the single-shot kernel; otherwise Kp % tk == 0."""
    Mp, Kp = x_p.shape
    Np = w_p.shape[1]

    flops = 2 * Mp * Np * Kp
    bytes_accessed = (
        Mp * Kp * x_p.dtype.itemsize   # activations
        + Kp * Np * 2                  # weights (bf16)
        + Np * 4                       # bias (f32)
        + Mp * Np * 4                  # output (f32)
    )
    cost = pl.CostEstimate(
        flops=flops, transcendentals=0, bytes_accessed=bytes_accessed
    )

    if tk == Kp:
        # Single reduction step: no K grid axis, no scratch, no pl.when.
        grid = (Mp // tm, Np // tn)
        return pl.pallas_call(
            _linear_single_k_kernel,
            out_shape=jax.ShapeDtypeStruct((Mp, Np), jnp.float32),
            grid=grid,
            in_specs=[
                pl.BlockSpec((tm, Kp), lambda i, j: (i, 0)),
                pl.BlockSpec((Kp, tn), lambda i, j: (0, j)),
                pl.BlockSpec((1, tn), lambda i, j: (0, j)),
            ],
            out_specs=pl.BlockSpec((tm, tn), lambda i, j: (i, j)),
            compiler_params=pltpu.CompilerParams(
                dimension_semantics=("parallel", "parallel"),
                vmem_limit_bytes=_VMEM_LIMIT_BYTES,
            ),
            cost_estimate=cost,
        )(x_p, w_p, b_p)

    # Large-K path: reduction axis last, accumulate into the resident output.
    grid = (Mp // tm, Np // tn, Kp // tk)
    return pl.pallas_call(
        _linear_tiled_k_kernel,
        out_shape=jax.ShapeDtypeStruct((Mp, Np), jnp.float32),
        grid=grid,
        in_specs=[
            pl.BlockSpec((tm, tk), lambda i, j, k: (i, k)),
            pl.BlockSpec((tk, tn), lambda i, j, k: (k, j)),
            pl.BlockSpec((1, tn), lambda i, j, k: (0, j)),
        ],
        out_specs=pl.BlockSpec((tm, tn), lambda i, j, k: (i, j)),
        compiler_params=pltpu.CompilerParams(
            dimension_semantics=("parallel", "parallel", "arbitrary"),
            vmem_limit_bytes=_VMEM_LIMIT_BYTES,
        ),
        cost_estimate=cost,
    )(x_p, w_p, b_p)


@functools.partial(jax.jit, static_argnums=(3,))
def _policy_apply(x, w_p, b_p, n_actions):
    """Jitted end-to-end policy apply."""
    B, K = x.shape
    Kp, Np = w_p.shape

    # --- tile heuristics (all shapes are static under jit) ------------------
    # M (batch): small batches use a single full-extent block -> no per-call
    # M padding.  Large batches tile at 512 rows (amortizes grid-step cost).
    if B <= 512:
        Mp, tm = B, B
    else:
        tm = 512
        Mp = _round_up(B, tm)
    # N: Np is a multiple of 128 by construction; wide N uses 512-wide tiles
    # so the x(i, k) panel is not re-fetched too many times per i.
    if Np <= 512:
        tn = Np
    elif Np % 512 == 0:
        tn = 512
    elif Np % 256 == 0:
        tn = 256
    else:
        tn = 128
    # K: single-shot if the weight's K was not padded (Kp == K), else tiled.
    tk = Kp if Kp == K else _TK

    if Mp == B and Kp == K:
        # Common inference case: hand x to the kernel untouched; the bf16 cast
        # happens in-register inside the kernel (no HBM pad/cast round trip).
        x_p = x
    else:
        # Large-batch / tiled-K regime: one fused pad+bf16 cast.  Relative
        # cost is small here since the matmul itself is substantial.
        x_p = (
            jnp.zeros((Mp, Kp), jnp.bfloat16)
            .at[:B, :K]
            .set(x.astype(jnp.bfloat16))
        )

    out_p = _linear_policy_padded(x_p, w_p, b_p, tm=tm, tn=tn, tk=tk)
    # TODO(synk): consumers that tolerate the padded slab could skip this
    # lane-narrow slice for a small extra win.
    return out_p[:B, :n_actions]


# ---------------------------------------------------------------------------
# Policy + NoopLearner
# ---------------------------------------------------------------------------
class LinearPolicy:
    """Concrete policy: maps state features [B, dim] -> scores [B, n_actions].
    Weights/bias are padded to lane-dense, MXU-friendly shapes and bf16-cast
    once at construction; every call reuses device-resident operands."""

    def __init__(self, dim, n_actions, key):
        kw, kb = jax.random.split(key)
        self.dim = dim
        self.n_actions = n_actions
        self.w = jax.random.normal(kw, (dim, n_actions), dtype=jnp.float32) * 0.05
        self.b = jax.random.normal(kb, (1, n_actions), dtype=jnp.float32) * 0.01

        # Lane-dense N (multiple of 128).  K is padded ONLY when it is large
        # enough to need reduction tiling, so small-K activations never have
        # to be re-padded per call.
        n_p = _round_up(n_actions, 128)
        k_p = dim if dim <= _K_SINGLE_SHOT_MAX else _round_up(dim, _TK)

        self.w_p = (
            jnp.zeros((k_p, n_p), jnp.bfloat16)
            .at[:dim, :n_actions]
            .set(self.w.astype(jnp.bfloat16))
        )
        self.b_p = (
            jnp.zeros((1, n_p), jnp.float32).at[:, :n_actions].set(self.b)
        )

    def __call__(self, state):
        return _policy_apply(state, self.w_p, self.b_p, self.n_actions)


class NoopLearner:
    """JAX port of macarico's NoopLearner: pure delegation to the wrapped
    policy (forward == policy(state)), and a constant zero objective."""

    def __init__(self, policy):
        self.policy = policy

    def __call__(self, state):
        return self.policy(state)

    def forward(self, state):
        return self.policy(state)

    def get_objective(self, loss):
        return 0.0


if __name__ == "__main__":
    key = jax.random.PRNGKey(0)
    k_state, k_policy = jax.random.split(key)

    batch, dim, n_actions = 8, 32, 8
    state = jax.random.normal(k_state, (batch, dim), dtype=jnp.float32)

    policy = LinearPolicy(dim, n_actions, k_policy)
    learner = NoopLearner(policy)

    out = learner(state)
    jax.block_until_ready(out)
    # second call reuses the compiled executable
    out2 = learner.forward(state)
    jax.block_until_ready(out2)

    # sanity: NoopLearner must be an exact pass-through of the policy.
    # Reference uses the same bf16 operands / f32 accumulation as the kernel.
    ref = (
        jnp.dot(
            state.astype(jnp.bfloat16),
            policy.w.astype(jnp.bfloat16),
            preferred_element_type=jnp.float32,
        )
        + policy.b
    )
    assert out.shape == (batch, n_actions)
    assert jnp.allclose(out, ref, atol=1e-3, rtol=1e-3)
    assert jnp.allclose(out, out2)
    assert learner.get_objective(1.23) == 0.0

    print("KERNEL_OK")
</pallas_src>

<mosaic_0001>
module attributes {stable_mosaic.version = 11 : i64} {
  func.func @_linear_single_k_kernel(%arg0: i32, %arg1: i32, %arg2: memref<8x32xf32, #tpu.memory_space<vmem>>, %arg3: memref<32x128xbf16, #tpu.memory_space<vmem>>, %arg4: memref<1x128xf32, #tpu.memory_space<vmem>>, %arg5: memref<8x128xf32, #tpu.memory_space<vmem>>) attributes {dimension_semantics = [#tpu.dimension_semantics<parallel>, #tpu.dimension_semantics<parallel>], iteration_bounds = array<i64: 1, 1>, scalar_prefetch = 0 : i64, scratch_operands = 0 : i64, tpu.core_type = #tpu.core_type<tc>, window_params = [{transform_indices = @transform_0, window_bounds = array<i64: 8, 32>}, {transform_indices = @transform_1, window_bounds = array<i64: 32, 128>}, {transform_indices = @transform_2, window_bounds = array<i64: 1, 128>}, {transform_indices = @transform_3, window_bounds = array<i64: 8, 128>}]} {
    %c0 = arith.constant 0 : index
    %c0_0 = arith.constant 0 : index
    %0 = vector.load %arg2[%c0, %c0_0] : memref<8x32xf32, #tpu.memory_space<vmem>>, vector<8x32xf32>
    %1 = arith.truncf %0 : vector<8x32xf32> to vector<8x32xbf16>
    %c0_1 = arith.constant 0 : index
    %c0_2 = arith.constant 0 : index
    %2 = vector.load %arg3[%c0_1, %c0_2] : memref<32x128xbf16, #tpu.memory_space<vmem>>, vector<32x128xbf16>
    %cst = arith.constant dense<0.000000e+00> : vector<8x128xf32>
    %3 = tpu.matmul %1, %2, %cst {dimension_numbers = #tpu.dot_dimension_numbers<[1], [0], [0], [1], [0, 0, 1, 1], [], []>} : vector<8x32xbf16>, vector<32x128xbf16>, vector<8x128xf32> -> vector<8x128xf32>
    %c0_3 = arith.constant 0 : index
    %c0_4 = arith.constant 0 : index
    %4 = vector.load %arg4[%c0_3, %c0_4] : memref<1x128xf32, #tpu.memory_space<vmem>>, vector<1x128xf32>
    %5 = vector.broadcast %4 : vector<1x128xf32> to vector<8x128xf32>
    %6 = arith.addf %3, %5 : vector<8x128xf32>
    %c0_5 = arith.constant 0 : index
    %c0_6 = arith.constant 0 : index
    %7 = vector.load %arg5[%c0_5, %c0_6] : memref<8x128xf32, #tpu.memory_space<vmem>>, vector<8x128xf32>
    tpu.vector_store %arg5[%c0_5, %c0_6], %6 {strides = array<i32>} : memref<8x128xf32, #tpu.memory_space<vmem>>, vector<8x128xf32>,
    return
  }
  func.func @transform_0(%arg0: i32, %arg1: i32) -> (i32, i32) {
    %c0_i32 = arith.constant 0 : i32
    %c0_i32_0 = arith.constant 0 : i32
    return %arg0, %c0_i32 : i32, i32
  }
  func.func @transform_1(%arg0: i32, %arg1: i32) -> (i32, i32) {
    %c0_i32 = arith.constant 0 : i32
    %c0_i32_0 = arith.constant 0 : i32
    return %c0_i32, %arg1 : i32, i32
  }
  func.func @transform_2(%arg0: i32, %arg1: i32) -> (i32, i32) {
    %c0_i32 = arith.constant 0 : i32
    %c0_i32_0 = arith.constant 0 : i32
    return %c0_i32, %arg1 : i32, i32
  }
  func.func @transform_3(%arg0: i32, %arg1: i32) -> (i32, i32) {
    %c0_i32 = arith.constant 0 : i32
    return %arg0, %arg1 : i32, i32
  }
}

</mosaic_0001>

<llo_original>
// kernel: _policy_apply.1
$region0: #{_policy_apply.1}
  #allocation0 [shape = 'u32[]', space=smem, size = 0x4, offset = 0x4, fixed_abs, tag = 'smem constant byte address 0x4 - core index']
  #allocation1 [shape = 'u32[144,128]{1,0:T(1,128)}', space=vmem, size = 0x12000, scoped, tag = 'internal scratch']
  %s0 = inlined_call_operand.hbm [shape: f32[8,32], index: 0, kind: input, shape index: {}]
  %s1 = inlined_call_operand.hbm [shape: bf16[32,128], index: 1, kind: input, shape index: {}]
  %s2 = inlined_call_operand.vmem [shape: f32[1,128], index: 2, kind: input, shape index: {}]
  %s3 = inlined_call_operand.hbm [shape: f32[8,128], index: 3, kind: output, shape index: {}]
  %s4 = sld [smem:[#allocation0]]
  $region30: #{_policy_apply.1} parent=0
    _
  %s6 = ssub.s32 1, %s4
  %s7 = scalar_select 0, %s6, %s4
  $region1: #{_policy_apply.1} parent=0
    #allocation2 [shape = 'u8[4096]{0}', space=vmem, size = 0x1000, scoped, tag = 'input window, operand 0, single buffered']
    #allocation3 [shape = 's32[1]{0}', space=sflag, size = 0x4, scoped, tag = 'scoped memory for _policy_apply.1']
    #allocation4 [shape = 's32[1]{0}', space=sflag, size = 0x4, scoped, tag = 'scoped memory for _policy_apply.1']
    #allocation5 [shape = 'u8[8192]{0}', space=vmem, size = 0x2000, scoped, tag = 'input window, operand 1, single buffered']
    #allocation6 [shape = 's32[1]{0}', space=sflag, size = 0x4, scoped, tag = 'scoped memory for _policy_apply.1']
    #allocation7 [shape = 'u8[4096]{0}', space=vmem, size = 0x1000, scoped, tag = 'output window, operand 0, single buffered']
    %8 = vsyncpa [#allocation3], 0
    %9 = vsyncpa [#allocation6], 0
    %10 = vsyncpa [#allocation4], 0
    // Predicated region
    $region2: #{_policy_apply.1} parent=1 // pred_check
      _
    $region3: #{_policy_apply.1} parent=1 // pred_check_branch
      %12 = sbr.rel (0) target = $region5
    $region4: #{_policy_apply.1} parent=1 // pred_region
      %s14 = ssub.s32 128, 128
      %15 = vsyncadd [#allocation3], %s14
      %s17 = sshll.u32 [#allocation2], 4
      %s18 = int_to_ptr.vmem [resolvable:$true] %s17
      %20 = dma.hbm_to_vmem [thread:$0]  %s0, 128, %s18, [#allocation3]
    $region5: #{_policy_apply.1} parent=1 // pred_fallthru
      _
    // Predicated region
    $region6: #{_policy_apply.1} parent=1 // pred_check
      _
    $region7: #{_policy_apply.1} parent=1 // pred_check_branch
      %22 = sbr.rel (0) target = $region9
    $region8: #{_policy_apply.1} parent=1 // pred_region
      %s24 = ssub.s32 256, 256
      %25 = vsyncadd [#allocation6], %s24
      %s26 = sshll.u32 [#allocation5], 4
      %s27 = int_to_ptr.vmem [resolvable:$true] %s26
      %32 = dma.hbm_to_vmem [thread:$0]  %s1, 256, %s27, [#allocation6], 64, 64, 4
    $region9: #{_policy_apply.1} parent=1 // pred_fallthru
      _
    // Predicated region
    $region10: #{_policy_apply.1} parent=1 // pred_check
      _
    $region11: #{_policy_apply.1} parent=1 // pred_check_branch
      %34 = sbr.rel (0) target = $region13
    $region12: #{_policy_apply.1} parent=1 // pred_region
      _
    $region13: #{_policy_apply.1} parent=1 // pred_fallthru
      _
    // Predicated region
    $region14: #{_policy_apply.1} parent=1 // pred_check
      _
    $region15: #{_policy_apply.1} parent=1 // pred_check_branch
      %36 = sbr.rel (0) target = $region17
    $region16: #{_policy_apply.1} parent=1 // pred_region
      %37 = dma.done [#allocation3], 128
    $region17: #{_policy_apply.1} parent=1 // pred_fallthru
      _
    // Predicated region
    $region18: #{_policy_apply.1} parent=1 // pred_check
      _
    $region19: #{_policy_apply.1} parent=1 // pred_check_branch
      %39 = sbr.rel (0) target = $region21
    $region20: #{_policy_apply.1} parent=1 // pred_region
      %40 = dma.done [#allocation6], 256
    $region21: #{_policy_apply.1} parent=1 // pred_fallthru
      _
    %v42 = vld [vmem:[#allocation2] sm:$0xff]
    %v43 = vpack.c.bf16 %v42, %v42
    %v44 = vld [vmem:[#allocation5] sm:$0xf]
    %v45 = vld [vmem:[#allocation5 + $0x4] sm:$0xf]
    %v46 = vld [vmem:[#allocation5 + $0x8] sm:$0xf]
    %v47 = vld [vmem:[#allocation5 + $0xc] sm:$0xf]
    %v48 = vld [vmem:[%s2] sm:$0x1]
    %v50 = vlaneseq
    %v51 = vshrl.u32 %v50, 7
    %v52 = vsub.s32 0, %v51
    %v53 = vrot.slane %v48, %v52
    %v59 = vunpack.c.l.b16 %v44
    %v60 = vunpack.c.l.b16 %v45
    %v61 = vunpack.c.l.b16 %v46
    %v62 = vunpack.c.l.b16 %v47
    %v63 = vpack.c.b16 %v60, %v59
    %v64 = vpack.c.b16 %v62, %v61
    %vm67 = vcmask 261120
    %v69 = vsel %vm67, %v43, 0
    %71 = vmatprep.subr.bf16.mxu0 0
    %72 = vmatpush1.bf16.msra.mxu0 %v63
    %73 = vmatprep.subr.bf16.mxu0 0
    %74 = vmatpush1.bf16.msra.mxu0 %v64
    %75 = vmatprep.subr.bf16.mxu0 0
    %76 = vmatpush1.bf16.msra.mxu0 0
    %77 = vmatprep.subr.bf16.mxu0 0
    %78 = vmatpush1.bf16.msra.mxu0 0
    %79 = vmatprep.subr.bf16.mxu0 0
    %80 = vmatpush1.bf16.msra.mxu0 0
    %81 = vmatprep.subr.bf16.mxu0 0
    %82 = vmatpush1.bf16.msra.mxu0 0
    %83 = vmatprep.subr.bf16.mxu0 0
    %84 = vmatpush1.bf16.msra.mxu0 0
    %85 = vmatprep.subr.bf16.mxu0 0
    %86 = vmatpush1.bf16.msra.mxu0 0
    %87 = vmatprep.subr.bf16.mxu0 0
    %88 = vmatpush1.bf16.msra.mxu0 0
    %89 = vmatprep.subr.bf16.mxu0 0
    %90 = vmatpush1.bf16.msra.mxu0 0
    %91 = vmatprep.subr.bf16.mxu0 0
    %92 = vmatpush1.bf16.msra.mxu0 0
    %93 = vmatprep.subr.bf16.mxu0 0
    %94 = vmatpush1.bf16.msra.mxu0 0
    %95 = vmatprep.subr.bf16.mxu0 0
    %96 = vmatpush1.bf16.msra.mxu0 0
    %97 = vmatprep.subr.bf16.mxu0 0
    %98 = vmatpush1.bf16.msra.mxu0 0
    %99 = vmatprep.subr.bf16.mxu0 0
    %100 = vmatpush1.bf16.msra.mxu0 0
    %101 = vmatprep.subr.bf16.mxu0 0
    %102 = vmatpush1.bf16.msra.mxu0 0
    %103 = vmatprep.mubr.bf16.mxu0 0
    %104 = vmatmul.mubr.bf16.gmra.mrb[0].mxu0 %v69
    %v105 = vpop.f32.mrb[0].mxu0
    %v106 = vadd.f32 %v53, %v105
    %v107 = vpop.f32.mrb[0].mxu0
    %v108 = vpop.f32.mrb[0].mxu0
    %v109 = vpop.f32.mrb[0].mxu0
    %110 = vdwg.mxu0
    %111 = vst [vmem:[#allocation7] sm:$0xff] %v106
    // Predicated region
    $region22: #{_policy_apply.1} parent=1 // pred_check
      _
    $region23: #{_policy_apply.1} parent=1 // pred_check_branch
      %113 = sbr.rel (0) target = $region25
    $region24: #{_policy_apply.1} parent=1 // pred_region
      %s115 = ssub.s32 128, 128
      %116 = vsyncadd [#allocation4], %s115
      %s118 = sshll.u32 [#allocation7], 4
      %s119 = int_to_ptr.vmem [resolvable:$true] %s118
      %121 = dma.vmem_to_hbm [thread:$0]  %s119, 128, %s3, [#allocation4]
    $region25: #{_policy_apply.1} parent=1 // pred_fallthru
      _
    // Predicated region
    $region26: #{_policy_apply.1} parent=1 // pred_check
      _
    $region27: #{_policy_apply.1} parent=1 // pred_check_branch
      %123 = sbr.rel (0) target = $region29
    $region28: #{_policy_apply.1} parent=1 // pred_region
      %124 = dma.done [#allocation4], 128
    $region29: #{_policy_apply.1} parent=1 // pred_fallthru
      _
    %125 = vsyncpa [#allocation3], 1
    %126 = vsyncpa [#allocation6], 1
    %127 = vsyncpa [#allocation4], 1

</llo_original>
